<compile_context>
chip_gen: v5e
topology: v5e:2x2
jax: 0.10.0
libtpu: 0.0.40
codegen_flags: <defaults>
</compile_context>

<pallas_src>
import math
import numpy as np
import jax
import jax.numpy as jnp
from jax.experimental import pallas as pl
from jax.experimental.pallas import tpu as pltpu


def _round_up(x, m):
    return ((x + m - 1) // m) * m


def _vmem_capacity_bytes():
    """Physical VMEM per TensorCore; conservative fallback if query fails."""
    try:
        info = pltpu.get_tpu_info()
        cap = getattr(info, "vmem_capacity_bytes", None)
        if cap:
            return int(cap)
    except Exception:
        pass
    return 64 * 1024 * 1024  # v7x per-TC size; safe lower bound everywhere


# ----------------------------------------------------------------------------
# Kernel bodies
# ----------------------------------------------------------------------------
def _make_resident_kernel(precision):
    def kernel(x_ref, w1_ref, b1_ref, w2_ref, b2_ref, o_ref):
        # Layer 1: x @ W1 + b1, ReLU (MXU matmul, f32 accumulate; VPU epilogue).
        h = jnp.dot(x_ref[...], w1_ref[...],
                    preferred_element_type=jnp.float32, precision=precision)
        h = jnp.maximum(h + b1_ref[...], 0.0)
        # Layer 2: h @ W2 + b2, ReLU.
        o = jnp.dot(h.astype(w2_ref.dtype), w2_ref[...],
                    preferred_element_type=jnp.float32, precision=precision)
        o_ref[...] = jnp.maximum(o + b2_ref[...], 0.0).astype(o_ref.dtype)
    return kernel


def _make_stream_kernel(precision):
    # Hidden dimension is chunked on an "arbitrary" grid axis:
    #   h_j  = relu(x @ W1[:, j*tk:(j+1)*tk] + b1[j*tk:(j+1)*tk])
    #   acc += h_j @ W2[j*tk:(j+1)*tk, :]
    # ReLU is elementwise over the hidden dim, so chunking is exact.
    def kernel(x_ref, w1_ref, b1_ref, w2_ref, b2_ref, o_ref, acc_ref):
        j = pl.program_id(1)

        @pl.when(j == 0)
        def _():
            acc_ref[...] = jnp.zeros_like(acc_ref)

        h = jnp.dot(x_ref[...], w1_ref[...],
                    preferred_element_type=jnp.float32, precision=precision)
        h = jnp.maximum(h + b1_ref[...], 0.0)
        acc_ref[...] += jnp.dot(h.astype(w2_ref.dtype), w2_ref[...],
                                preferred_element_type=jnp.float32,
                                precision=precision)

        @pl.when(j == pl.num_programs(1) - 1)
        def _():
            o_ref[...] = jnp.maximum(acc_ref[...] + b2_ref[...],
                                     0.0).astype(o_ref.dtype)
    return kernel


# ----------------------------------------------------------------------------
# Forward (weights already padded / cast)
# ----------------------------------------------------------------------------
def _decoder_forward_padded(x, w1p, b1p, w2p, b2p, *, H, O, Hp, Op,
                            compute_dtype, precision,
                            tile_b=None, tk=None, variant=None):
    B = x.shape[0]
    assert x.shape[1] == H, f"expected input feature dim {H}, got {x.shape[1]}"
    out_dtype = x.dtype

    # ---- Batch tiling: single big tile for small B; ~256-row tiles otherwise.
    b8 = _round_up(max(B, 1), 8)
    if tile_b is None:
        n_steps = max(1, -(-b8 // 256))          # 1 step up to 256 rows, then
        tile_b = _round_up(-(-b8 // n_steps), 8)  # >=2 steps (>=4 for B>1024)
    Bp = _round_up(B, tile_b)
    nb = Bp // tile_b

    csz = np.dtype(compute_dtype).itemsize
    osz = np.dtype(out_dtype).itemsize
    cap = _vmem_capacity_bytes()

    # Footprint of the weight-resident variant.
    resident_bytes = (
        2 * tile_b * Hp * csz        # x tile (double buffer)
        + 2 * tile_b * Op * osz      # out tile (double buffer)
        + (Hp * Hp + Hp * Op) * csz  # W1, W2 (Buffered(1))
        + (Hp + Op) * 4              # biases (f32)
        + tile_b * (Hp + Op) * 4     # live f32 h / o values
    )
    if variant is None:
        variant = "resident" if resident_bytes <= int(0.7 * cap) else "stream"

    # ---- Conditional activation padding / cast (skip when already aligned).
    if (Bp != B) or (Hp != H):
        xp = jnp.zeros((Bp, Hp), compute_dtype).at[:B, :H].set(
            x.astype(compute_dtype))
    else:
        xp = x if x.dtype == compute_dtype else x.astype(compute_dtype)

    flops = 2 * Bp * Hp * (Hp + Op)
    resident = pl.Buffered(1)  # grid-invariant operands: one VMEM copy, no re-DMA

    if variant == "resident":
        weight_reads = 1
        footprint = resident_bytes
        grid = (nb,)
        in_specs = [
            pl.BlockSpec((tile_b, Hp), lambda i: (i, 0)),                      # x
            pl.BlockSpec((Hp, Hp), lambda i: (0, 0), pipeline_mode=resident),  # W1
            pl.BlockSpec((1, Hp), lambda i: (0, 0), pipeline_mode=resident),   # b1
            pl.BlockSpec((Hp, Op), lambda i: (0, 0), pipeline_mode=resident),  # W2
            pl.BlockSpec((1, Op), lambda i: (0, 0), pipeline_mode=resident),   # b2
        ]
        out_specs = pl.BlockSpec((tile_b, Op), lambda i: (i, 0))
        scratch_shapes = []
        dim_sem = ("parallel",)
        kernel = _make_resident_kernel(precision)
    else:
        # Hidden-chunk size: largest multiple of 128 (<=512) dividing Hp.
        if tk is None:
            tk = max(c for c in (128, 256, 384, 512) if Hp % c == 0)
        assert Hp % tk == 0
        nk = Hp // tk
        weight_reads = nb  # weight blocks re-streamed per batch tile
        footprint = (
            2 * tile_b * Hp * csz + 2 * tile_b * Op * osz
            + 2 * (Hp * tk + tk * Op) * csz     # double-buffered weight chunks
            + 2 * tk * 4 + Op * 4               # bias chunks
            + tile_b * Op * 4                   # f32 accumulator
            + tile_b * tk * 4                   # live f32 h chunk
        )
        grid = (nb, nk)
        in_specs = [
            pl.BlockSpec((tile_b, Hp), lambda i, j: (i, 0)),                       # x
            pl.BlockSpec((Hp, tk), lambda i, j: (0, j)),                           # W1 chunk
            pl.BlockSpec((1, tk), lambda i, j: (0, j)),                            # b1 chunk
            pl.BlockSpec((tk, Op), lambda i, j: (j, 0)),                           # W2 chunk
            pl.BlockSpec((1, Op), lambda i, j: (0, 0), pipeline_mode=resident),    # b2
        ]
        out_specs = pl.BlockSpec((tile_b, Op), lambda i, j: (i, 0))
        scratch_shapes = [pltpu.VMEM((tile_b, Op), jnp.float32)]
        dim_sem = ("parallel", "arbitrary")
        kernel = _make_stream_kernel(precision)

    # ---- VMEM limit clamped to physical capacity (v7x = 64 MiB per TC).
    vmem_limit = min(int(0.85 * cap), int(footprint) + (16 << 20))
    vmem_limit = max(vmem_limit, 4 << 20)

    bytes_accessed = int(
        Bp * Hp * csz                                   # x
        + weight_reads * (Hp * Hp + Hp * Op) * csz      # W1, W2
        + (Hp + Op) * 4                                 # biases
        + Bp * Op * osz                                 # out
    )
    cost = pl.CostEstimate(flops=int(flops), transcendentals=0,
                           bytes_accessed=bytes_accessed)

    out = pl.pallas_call(
        kernel,
        out_shape=jax.ShapeDtypeStruct((Bp, Op), out_dtype),
        grid_spec=pltpu.PrefetchScalarGridSpec(
            num_scalar_prefetch=0,
            grid=grid,
            in_specs=in_specs,
            out_specs=out_specs,
            scratch_shapes=scratch_shapes,
        ),
        compiler_params=pltpu.CompilerParams(
            dimension_semantics=dim_sem,
            vmem_limit_bytes=int(vmem_limit),
        ),
        cost_estimate=cost,
    )(xp, w1p, b1p, w2p, b2p)

    if (Bp != B) or (Op != O):
        out = out[:B, :O]
    return out


# ----------------------------------------------------------------------------
# Module wrapper: pad/cast weights ONCE (hoisted out of the per-call path).
# ----------------------------------------------------------------------------
class PallasDecoder:
    """relu(relu(x @ W1 + b1) @ W2 + b2) with pre-padded, pre-cast weights.

    w1_t: (H, H), w2_t: (H, O) -- nn.Linear weights already transposed to
    (in, out); b1: (H,), b2: (O,).
    """

    def __init__(self, w1_t, b1, w2_t, b2, *, compute_dtype=jnp.bfloat16,
                 precision=None, lane=128):
        H, H2 = w1_t.shape
        assert H == H2, "first Linear must be square (hidden -> hidden)"
        O = w2_t.shape[1]
        self.H, self.O = H, O
        self.Hp, self.Op = _round_up(H, lane), _round_up(O, lane)
        self.compute_dtype = compute_dtype
        self.precision = precision

        Hp, Op = self.Hp, self.Op
        b1 = jnp.reshape(b1, (1, -1)).astype(jnp.float32)
        b2 = jnp.reshape(b2, (1, -1)).astype(jnp.float32)
        # Zero padding is numerically exact: padded units see zero weights/bias
        # -> relu(0)=0 -> contribute nothing; padded lanes/rows are sliced off.
        self.w1p = jnp.zeros((Hp, Hp), compute_dtype).at[:H, :H].set(
            w1_t.astype(compute_dtype))
        self.w2p = jnp.zeros((Hp, Op), compute_dtype).at[:H, :O].set(
            w2_t.astype(compute_dtype))
        self.b1p = jnp.zeros((1, Hp), jnp.float32).at[:, :H].set(b1)
        self.b2p = jnp.zeros((1, Op), jnp.float32).at[:, :O].set(b2)
        # Materialize now so padding never lands on the per-call critical path.
        jax.block_until_ready((self.w1p, self.w2p, self.b1p, self.b2p))

    def __call__(self, x, *, tile_b=None, tk=None, variant=None):
        return _decoder_forward_padded(
            x, self.w1p, self.b1p, self.w2p, self.b2p,
            H=self.H, O=self.O, Hp=self.Hp, Op=self.Op,
            compute_dtype=self.compute_dtype, precision=self.precision,
            tile_b=tile_b, tk=tk, variant=variant)


def reference_forward(x, w1_t, b1, w2_t, b2):
    h = jnp.maximum(x @ w1_t + jnp.reshape(b1, (1, -1)), 0.0)
    return jnp.maximum(h @ w2_t + jnp.reshape(b2, (1, -1)), 0.0)


if __name__ == "__main__":
    key = jax.random.PRNGKey(0)

    def init_params(k, hidden, output):
        k_w1, k_b1, k_w2, k_b2 = jax.random.split(k, 4)
        bound = 1.0 / math.sqrt(hidden)
        w1 = jax.random.uniform(k_w1, (hidden, hidden), minval=-bound, maxval=bound)
        b1 = jax.random.uniform(k_b1, (hidden,), minval=-bound, maxval=bound)
        w2 = jax.random.uniform(k_w2, (output, hidden), minval=-bound, maxval=bound)
        b2 = jax.random.uniform(k_b2, (output,), minval=-bound, maxval=bound)
        # PyTorch stores (out, in); pre-transpose to (in, out).
        return (w1.T.astype(jnp.float32), b1.astype(jnp.float32),
                w2.T.astype(jnp.float32), b2.astype(jnp.float32))

    k0, k1, k2, k3 = jax.random.split(key, 4)

    # --- Test 1: small shapes, explicit f32 path (weight-resident variant). ---
    batch, hidden, output = 8, 32, 16
    w1_t, b1, w2_t, b2 = init_params(k0, hidden, output)
    x = jax.random.normal(k1, (batch, hidden), dtype=jnp.float32)
    ref = reference_forward(x, w1_t, b1, w2_t, b2)

    dec_f32 = PallasDecoder(w1_t, b1, w2_t, b2, compute_dtype=jnp.float32)
    out = jax.block_until_ready(dec_f32(x))
    assert out.shape == (batch, output)
    assert jnp.allclose(out, ref, atol=1e-5, rtol=1e-5)

    # --- Test 2: default bf16-operand path (MXU-native; f32 accumulation). ---
    dec_bf16 = PallasDecoder(w1_t, b1, w2_t, b2)  # compute_dtype=bf16 by default
    out_bf16 = jax.block_until_ready(dec_bf16(x))
    assert jnp.allclose(out_bf16, ref, atol=5e-2, rtol=5e-2)

    # --- Test 3: streamed hidden-chunk variant (v7x / large-H path), with an
    #     unaligned batch to exercise conditional padding + accumulation. ---
    batch3, hidden3, output3 = 12, 256, 128
    w1_t3, b13, w2_t3, b23 = init_params(k2, hidden3, output3)
    x3 = jax.random.normal(k3, (batch3, hidden3), dtype=jnp.float32)
    ref3 = reference_forward(x3, w1_t3, b13, w2_t3, b23)

    dec3 = PallasDecoder(w1_t3, b13, w2_t3, b23)  # bf16 operands
    out3 = jax.block_until_ready(dec3(x3, variant="stream", tk=128))
    assert out3.shape == (batch3, output3)
    assert jnp.allclose(out3, ref3, atol=5e-2, rtol=5e-2)

    print("KERNEL_OK")
</pallas_src>

<mosaic_0001>
module attributes {stable_mosaic.version = 11 : i64} {
  func.func @kernel(%arg0: i32, %arg1: memref<8x128xf32, #tpu.memory_space<vmem>>, %arg2: memref<128x128xf32, #tpu.memory_space<vmem>>, %arg3: memref<1x128xf32, #tpu.memory_space<vmem>>, %arg4: memref<128x128xf32, #tpu.memory_space<vmem>>, %arg5: memref<1x128xf32, #tpu.memory_space<vmem>>, %arg6: memref<8x128xf32, #tpu.memory_space<vmem>>) attributes {dimension_semantics = [#tpu.dimension_semantics<parallel>], iteration_bounds = array<i64: 1>, scalar_prefetch = 0 : i64, scratch_operands = 0 : i64, tpu.core_type = #tpu.core_type<tc>, window_params = [{transform_indices = @transform_0, window_bounds = array<i64: 8, 128>}, {pipeline_mode = #tpu.pipeline_mode<synchronous>, transform_indices = @transform_1, window_bounds = array<i64: 128, 128>}, {pipeline_mode = #tpu.pipeline_mode<synchronous>, transform_indices = @transform_2, window_bounds = array<i64: 1, 128>}, {pipeline_mode = #tpu.pipeline_mode<synchronous>, transform_indices = @transform_3, window_bounds = array<i64: 128, 128>}, {pipeline_mode = #tpu.pipeline_mode<synchronous>, transform_indices = @transform_4, window_bounds = array<i64: 1, 128>}, {transform_indices = @transform_5, window_bounds = array<i64: 8, 128>}]} {
    %c0 = arith.constant 0 : index
    %c0_0 = arith.constant 0 : index
    %0 = vector.load %arg1[%c0, %c0_0] : memref<8x128xf32, #tpu.memory_space<vmem>>, vector<8x128xf32>
    %c0_1 = arith.constant 0 : index
    %c0_2 = arith.constant 0 : index
    %1 = vector.load %arg2[%c0_1, %c0_2] : memref<128x128xf32, #tpu.memory_space<vmem>>, vector<128x128xf32>
    %cst = arith.constant dense<0.000000e+00> : vector<8x128xf32>
    %2 = tpu.matmul %0, %1, %cst {dimension_numbers = #tpu.dot_dimension_numbers<[1], [0], [0], [1], [0, 0, 1, 1], [], []>} : vector<8x128xf32>, vector<128x128xf32>, vector<8x128xf32> -> vector<8x128xf32>
    %c0_3 = arith.constant 0 : index
    %c0_4 = arith.constant 0 : index
    %3 = vector.load %arg3[%c0_3, %c0_4] : memref<1x128xf32, #tpu.memory_space<vmem>>, vector<1x128xf32>
    %4 = vector.broadcast %3 : vector<1x128xf32> to vector<8x128xf32>
    %5 = arith.addf %2, %4 : vector<8x128xf32>
    %cst_5 = arith.constant 0.000000e+00 : f32
    %6 = vector.broadcast %cst_5 : f32 to vector<8x128xf32>
    %7 = arith.maximumf %5, %6 : vector<8x128xf32>
    %c0_6 = arith.constant 0 : index
    %c0_7 = arith.constant 0 : index
    %8 = vector.load %arg4[%c0_6, %c0_7] : memref<128x128xf32, #tpu.memory_space<vmem>>, vector<128x128xf32>
    %cst_8 = arith.constant dense<0.000000e+00> : vector<8x128xf32>
    %9 = tpu.matmul %7, %8, %cst_8 {dimension_numbers = #tpu.dot_dimension_numbers<[1], [0], [0], [1], [0, 0, 1, 1], [], []>} : vector<8x128xf32>, vector<128x128xf32>, vector<8x128xf32> -> vector<8x128xf32>
    %c0_9 = arith.constant 0 : index
    %c0_10 = arith.constant 0 : index
    %10 = vector.load %arg5[%c0_9, %c0_10] : memref<1x128xf32, #tpu.memory_space<vmem>>, vector<1x128xf32>
    %11 = vector.broadcast %10 : vector<1x128xf32> to vector<8x128xf32>
    %12 = arith.addf %9, %11 : vector<8x128xf32>
    %cst_11 = arith.constant 0.000000e+00 : f32
    %13 = vector.broadcast %cst_11 : f32 to vector<8x128xf32>
    %14 = arith.maximumf %12, %13 : vector<8x128xf32>
    %c0_12 = arith.constant 0 : index
    %c0_13 = arith.constant 0 : index
    %15 = vector.load %arg6[%c0_12, %c0_13] : memref<8x128xf32, #tpu.memory_space<vmem>>, vector<8x128xf32>
    tpu.vector_store %arg6[%c0_12, %c0_13], %14 {strides = array<i32>} : memref<8x128xf32, #tpu.memory_space<vmem>>, vector<8x128xf32>,
    return
  }
  func.func @transform_0(%arg0: i32) -> (i32, i32) {
    %c0_i32 = arith.constant 0 : i32
    %c0_i32_0 = arith.constant 0 : i32
    return %arg0, %c0_i32 : i32, i32
  }
  func.func @transform_1(%arg0: i32) -> (i32, i32) {
    %c0_i32 = arith.constant 0 : i32
    %c0_i32_0 = arith.constant 0 : i32
    %c0_i32_1 = arith.constant 0 : i32
    return %c0_i32, %c0_i32_0 : i32, i32
  }
  func.func @transform_2(%arg0: i32) -> (i32, i32) {
    %c0_i32 = arith.constant 0 : i32
    %c0_i32_0 = arith.constant 0 : i32
    %c0_i32_1 = arith.constant 0 : i32
    return %c0_i32, %c0_i32_0 : i32, i32
  }
  func.func @transform_3(%arg0: i32) -> (i32, i32) {
    %c0_i32 = arith.constant 0 : i32
    %c0_i32_0 = arith.constant 0 : i32
    %c0_i32_1 = arith.constant 0 : i32
    return %c0_i32, %c0_i32_0 : i32, i32
  }
  func.func @transform_4(%arg0: i32) -> (i32, i32) {
    %c0_i32 = arith.constant 0 : i32
    %c0_i32_0 = arith.constant 0 : i32
    %c0_i32_1 = arith.constant 0 : i32
    return %c0_i32, %c0_i32_0 : i32, i32
  }
  func.func @transform_5(%arg0: i32) -> (i32, i32) {
    %c0_i32 = arith.constant 0 : i32
    %c0_i32_0 = arith.constant 0 : i32
    return %arg0, %c0_i32 : i32, i32
  }
}

</mosaic_0001>

<llo_original>
// kernel: tpu_custom_call.1
$region0: #{tpu_custom_call.1}
  #allocation0 [shape = 'u32[]', space=smem, size = 0x4, offset = 0x4, fixed_abs, tag = 'smem constant byte address 0x4 - core index']
  #allocation1 [shape = 'u32[72,128]{1,0:T(1,128)}', space=vmem, size = 0x9000, scoped, tag = 'internal scratch']
  %s0 = inlined_call_operand.hbm [shape: f32[8,128], index: 0, kind: input, shape index: {}]
  %s1 = inlined_call_operand.hbm [shape: f32[128,128], index: 1, kind: input, shape index: {}]
  %s2 = inlined_call_operand.vmem [shape: f32[1,128], index: 2, kind: input, shape index: {}]
  %s3 = inlined_call_operand.hbm [shape: f32[128,128], index: 3, kind: input, shape index: {}]
  %s4 = inlined_call_operand.vmem [shape: f32[1,128], index: 4, kind: input, shape index: {}]
  %s5 = inlined_call_operand.hbm [shape: f32[8,128], index: 5, kind: output, shape index: {}]
  %s6 = sld [smem:[#allocation0]]
  $region42: #{tpu_custom_call.1} parent=0
    _
  %s8 = ssub.s32 1, %s6
  %s9 = scalar_select 0, %s8, %s6
  $region1: #{tpu_custom_call.1} parent=0
    #allocation2 [shape = 'u8[4096]{0}', space=vmem, size = 0x1000, scoped, tag = 'input window, operand 0, single buffered']
    #allocation3 [shape = 's32[1]{0}', space=sflag, size = 0x4, scoped, tag = 'scoped memory for tpu_custom_call.1']
    #allocation4 [shape = 's32[1]{0}', space=sflag, size = 0x4, scoped, tag = 'scoped memory for tpu_custom_call.1']
    #allocation5 [shape = 'u8[65536]{0}', space=vmem, size = 0x10000, scoped, tag = 'input window, operand 1, single buffered']
    #allocation6 [shape = 's32[1]{0}', space=sflag, size = 0x4, scoped, tag = 'scoped memory for tpu_custom_call.1']
    #allocation7 [shape = 'u8[65536]{0}', space=vmem, size = 0x10000, scoped, tag = 'input window, operand 3, single buffered']
    #allocation8 [shape = 'u8[4096]{0}', space=vmem, size = 0x1000, scoped, tag = 'output window, operand 0, single buffered']
    %10 = vsyncpa [#allocation3], 0
    %11 = vsyncpa [#allocation6], 0
    %12 = vsyncpa [#allocation4], 0
    // Predicated region
    $region2: #{tpu_custom_call.1} parent=1 // pred_check
      _
    $region3: #{tpu_custom_call.1} parent=1 // pred_check_branch
      %14 = sbr.rel (0) target = $region5
    $region4: #{tpu_custom_call.1} parent=1 // pred_region
      %16 = vsyncadd [#allocation3], 0
      %s18 = sshll.u32 %s0, 4
      %s19 = int_to_ptr.hbm [resolvable:$true] %s18
      %s20 = sshll.u32 [#allocation2], 4
      %s21 = int_to_ptr.vmem [resolvable:$true] %s20
      %23 = dma.hbm_to_vmem [thread:$0]  %s19, 128, %s21, [#allocation3]
    $region5: #{tpu_custom_call.1} parent=1 // pred_fallthru
      _
    // Predicated region
    $region6: #{tpu_custom_call.1} parent=1 // pred_check
      _
    $region7: #{tpu_custom_call.1} parent=1 // pred_check_branch
      %25 = sbr.rel (0) target = $region9
    $region8: #{tpu_custom_call.1} parent=1 // pred_region
      %27 = vsyncadd [#allocation6], 0
      %s28 = sshll.u32 %s1, 4
      %s29 = int_to_ptr.hbm [resolvable:$true] %s28
      %s30 = sshll.u32 [#allocation5], 4
      %s31 = int_to_ptr.vmem [resolvable:$true] %s30
      %36 = dma.hbm_to_vmem [thread:$0]  %s29, 2048, %s31, [#allocation6], 128, 128, 8
    $region9: #{tpu_custom_call.1} parent=1 // pred_fallthru
      _
    // Predicated region
    $region10: #{tpu_custom_call.1} parent=1 // pred_check
      _
    $region11: #{tpu_custom_call.1} parent=1 // pred_check_branch
      %38 = sbr.rel (0) target = $region13
    $region12: #{tpu_custom_call.1} parent=1 // pred_region
      _
    $region13: #{tpu_custom_call.1} parent=1 // pred_fallthru
      _
    // Predicated region
    $region14: #{tpu_custom_call.1} parent=1 // pred_check
      _
    $region15: #{tpu_custom_call.1} parent=1 // pred_check_branch
      %40 = sbr.rel (0) target = $region17
    $region16: #{tpu_custom_call.1} parent=1 // pred_region
      %42 = vsyncadd [#allocation6], 0
      %s43 = sshll.u32 %s3, 4
      %s44 = int_to_ptr.hbm [resolvable:$true] %s43
      %s45 = sshll.u32 [#allocation7], 4
      %s46 = int_to_ptr.vmem [resolvable:$true] %s45
      %51 = dma.hbm_to_vmem [thread:$0]  %s44, 2048, %s46, [#allocation6], 128, 128, 8
    $region17: #{tpu_custom_call.1} parent=1 // pred_fallthru
      _
    // Predicated region
    $region18: #{tpu_custom_call.1} parent=1 // pred_check
      _
    $region19: #{tpu_custom_call.1} parent=1 // pred_check_branch
      %53 = sbr.rel (0) target = $region21
    $region20: #{tpu_custom_call.1} parent=1 // pred_region
      _
    $region21: #{tpu_custom_call.1} parent=1 // pred_fallthru
      _
    // Predicated region
    $region22: #{tpu_custom_call.1} parent=1 // pred_check
      _
    $region23: #{tpu_custom_call.1} parent=1 // pred_check_branch
      %55 = sbr.rel (0) target = $region25
    $region24: #{tpu_custom_call.1} parent=1 // pred_region
      %57 = dma.done [#allocation3], 128
    $region25: #{tpu_custom_call.1} parent=1 // pred_fallthru
      _
    // Predicated region
    $region26: #{tpu_custom_call.1} parent=1 // pred_check
      _
    $region27: #{tpu_custom_call.1} parent=1 // pred_check_branch
      %59 = sbr.rel (0) target = $region29
    $region28: #{tpu_custom_call.1} parent=1 // pred_region
      %61 = dma.done [#allocation6], 2048
    $region29: #{tpu_custom_call.1} parent=1 // pred_fallthru
      _
    // Predicated region
    $region30: #{tpu_custom_call.1} parent=1 // pred_check
      _
    $region31: #{tpu_custom_call.1} parent=1 // pred_check_branch
      %63 = sbr.rel (0) target = $region33
    $region32: #{tpu_custom_call.1} parent=1 // pred_region
      %65 = dma.done [#allocation6], 2048
    $region33: #{tpu_custom_call.1} parent=1 // pred_fallthru
      _
    %v66 = vld [vmem:[#allocation2] sm:$0xff]
    %v67 = vld [vmem:[#allocation5] sm:$0xff]
    %v68 = vld [vmem:[#allocation5 + $0x8] sm:$0xff]
    %v69 = vld [vmem:[#allocation5 + $0x10] sm:$0xff]
    %v70 = vld [vmem:[#allocation5 + $0x18] sm:$0xff]
    %v71 = vld [vmem:[#allocation5 + $0x20] sm:$0xff]
    %v72 = vld [vmem:[#allocation5 + $0x28] sm:$0xff]
    %v73 = vld [vmem:[#allocation5 + $0x30] sm:$0xff]
    %v74 = vld [vmem:[#allocation5 + $0x38] sm:$0xff]
    %v75 = vld [vmem:[#allocation5 + $0x40] sm:$0xff]
    %v76 = vld [vmem:[#allocation5 + $0x48] sm:$0xff]
    %v77 = vld [vmem:[#allocation5 + $0x50] sm:$0xff]
    %v78 = vld [vmem:[#allocation5 + $0x58] sm:$0xff]
    %v79 = vld [vmem:[#allocation5 + $0x60] sm:$0xff]
    %v80 = vld [vmem:[#allocation5 + $0x68] sm:$0xff]
    %v81 = vld [vmem:[#allocation5 + $0x70] sm:$0xff]
    %v82 = vld [vmem:[#allocation5 + $0x78] sm:$0xff]
    %v83 = vld [vmem:[%s2] sm:$0x1]
    %v85 = vperm.slane %v83, 0
    %87 = vmatpush.msra.mxu0 %v82
    %88 = vmatpush.msra.mxu0 %v81
    %89 = vmatpush.msra.mxu0 %v80
    %90 = vmatpush.msra.mxu0 %v79
    %91 = vmatpush.msra.mxu0 %v78
    %92 = vmatpush.msra.mxu0 %v77
    %93 = vmatpush.msra.mxu0 %v76
    %94 = vmatpush.msra.mxu0 %v75
    %95 = vmatpush.msra.mxu0 %v74
    %96 = vmatpush.msra.mxu0 %v73
    %97 = vmatpush.msra.mxu0 %v72
    %98 = vmatpush.msra.mxu0 %v71
    %99 = vmatpush.msra.mxu0 %v70
    %100 = vmatpush.msra.mxu0 %v69
    %101 = vmatpush.msra.mxu0 %v68
    %102 = vmatpush.msra.mxu0 %v67
    %103 = vmatmul.f32.gmra.mxu0 %v66
    %v104 = vpop.f32.mrf.mxu0
    %v105 = vadd.f32 %v85, %v104
    %106 = vdwg.mxu0
    %v107 = vmax.f32 %v105, 0.0
    %v108 = vld [vmem:[#allocation7] sm:$0xff]
    %v109 = vld [vmem:[#allocation7 + $0x8] sm:$0xff]
    %v110 = vld [vmem:[#allocation7 + $0x10] sm:$0xff]
    %v111 = vld [vmem:[#allocation7 + $0x18] sm:$0xff]
    %v112 = vld [vmem:[#allocation7 + $0x20] sm:$0xff]
    %v113 = vld [vmem:[#allocation7 + $0x28] sm:$0xff]
    %v114 = vld [vmem:[#allocation7 + $0x30] sm:$0xff]
    %v115 = vld [vmem:[#allocation7 + $0x38] sm:$0xff]
    %v116 = vld [vmem:[#allocation7 + $0x40] sm:$0xff]
    %v117 = vld [vmem:[#allocation7 + $0x48] sm:$0xff]
    %v118 = vld [vmem:[#allocation7 + $0x50] sm:$0xff]
    %v119 = vld [vmem:[#allocation7 + $0x58] sm:$0xff]
    %v120 = vld [vmem:[#allocation7 + $0x60] sm:$0xff]
    %v121 = vld [vmem:[#allocation7 + $0x68] sm:$0xff]
    %v122 = vld [vmem:[#allocation7 + $0x70] sm:$0xff]
    %v123 = vld [vmem:[#allocation7 + $0x78] sm:$0xff]
    %v124 = vld [vmem:[%s4] sm:$0x1]
    %v126 = vperm.slane %v124, 0
    %128 = vmatpush.msra.mxu0 %v123
    %129 = vmatpush.msra.mxu0 %v122
    %130 = vmatpush.msra.mxu0 %v121
    %131 = vmatpush.msra.mxu0 %v120
    %132 = vmatpush.msra.mxu0 %v119
    %133 = vmatpush.msra.mxu0 %v118
    %134 = vmatpush.msra.mxu0 %v117
    %135 = vmatpush.msra.mxu0 %v116
    %136 = vmatpush.msra.mxu0 %v115
    %137 = vmatpush.msra.mxu0 %v114
    %138 = vmatpush.msra.mxu0 %v113
    %139 = vmatpush.msra.mxu0 %v112
    %140 = vmatpush.msra.mxu0 %v111
    %141 = vmatpush.msra.mxu0 %v110
    %142 = vmatpush.msra.mxu0 %v109
    %143 = vmatpush.msra.mxu0 %v108
    %144 = vmatmul.f32.gmra.mxu0 %v107
    %v145 = vpop.f32.mrf.mxu0
    %v146 = vadd.f32 %v126, %v145
    %147 = vdwg.mxu0
    %v148 = vmax.f32 %v146, 0.0
    %149 = vst [vmem:[#allocation8] sm:$0xff] %v148
    // Predicated region
    $region34: #{tpu_custom_call.1} parent=1 // pred_check
      _
    $region35: #{tpu_custom_call.1} parent=1 // pred_check_branch
      %151 = sbr.rel (0) target = $region37
    $region36: #{tpu_custom_call.1} parent=1 // pred_region
      %153 = vsyncadd [#allocation4], 0
      %s155 = sshll.u32 [#allocation8], 4
      %s156 = int_to_ptr.vmem [resolvable:$true] %s155
      %s157 = sshll.u32 %s5, 4
      %s158 = int_to_ptr.hbm [resolvable:$true] %s157
      %160 = dma.vmem_to_hbm [thread:$0]  %s156, 128, %s158, [#allocation4]
    $region37: #{tpu_custom_call.1} parent=1 // pred_fallthru
      _
    // Predicated region
    $region38: #{tpu_custom_call.1} parent=1 // pred_check
      _
    $region39: #{tpu_custom_call.1} parent=1 // pred_check_branch
      %162 = sbr.rel (0) target = $region41
    $region40: #{tpu_custom_call.1} parent=1 // pred_region
      %164 = dma.done [#allocation4], 128
    $region41: #{tpu_custom_call.1} parent=1 // pred_fallthru
      _
    %165 = vsyncpa [#allocation3], 1
    %166 = vsyncpa [#allocation6], 1
    %167 = vsyncpa [#allocation4], 1

</llo_original>
